<compile_context>
chip_gen: v6e
topology: v6e:2x2x1
jax: 0.10.0
libtpu: 0.0.40
codegen_flags: <defaults>
</compile_context>

<pallas_src>
import functools
import numpy as np
import jax
import jax.numpy as jnp
from jax.experimental import pallas as pl
from jax.experimental.pallas import tpu as pltpu

K = 4  # tconv1 kernel size (fixed by the module)


def _make_kernel(TH, Wt, Cw, Cph, row_offsets):
    """Builds the per-(batch, row-tile) kernel; all sizes/offsets are static."""
    M = TH * Wt
    R = len(row_offsets)

    def kernel(alpha_ref, xsh_ref, w1f_ref, b1_ref, w2_ref, b2_ref, o_ref):
        # xsh_ref : (1, Hq, Wt, Cw)  bf16, width-taps folded into channels,
        #           resident in VMEM for the whole batch element.
        # w1f_ref : (R, Cw, Cph)     bf16 fused tconv1 weight (phases in columns)
        # w2_ref  : (Cph, Cph)       bf16 block-diagonal 1x1 tconv weight
        # b1_ref / b2_ref : (1, Cph) f32 biases (tiled over phases)
        # alpha_ref : (1, 1)         f32 PReLU slope in SMEM
        # o_ref   : (1, TH, Wt, Cph) f32 output tile (phases folded into lanes)
        t = pl.program_id(1)
        row0 = t * TH

        # --- stride-s transposed conv: R fused row-window matmuls (MXU) -------
        a0 = xsh_ref[0, pl.ds(row0 + row_offsets[0], TH), :, :]      # (TH, Wt, Cw) bf16
        acc = jnp.dot(a0.reshape(M, Cw), w1f_ref[0],
                      preferred_element_type=jnp.float32)            # (M, Cph) f32
        for i in range(1, R):
            ai = xsh_ref[0, pl.ds(row0 + row_offsets[i], TH), :, :]
            acc = acc + jnp.dot(ai.reshape(M, Cw), w1f_ref[i],
                                preferred_element_type=jnp.float32)

        # --- fused epilogue (f32 on the VPU) ----------------------------------
        alpha = alpha_ref[0, 0]
        out1 = acc + b1_ref[...]                                      # (M, Cph)
        out2 = jnp.where(out1 > 0, out1, alpha * out1)                # PReLU
        # 1x1 transposed conv == per-phase channel matmul (block-diag weight)
        out3 = jnp.dot(out2.astype(jnp.bfloat16), w2_ref[...],
                       preferred_element_type=jnp.float32)
        out4 = out1 + out3 + b2_ref[...]
        out4 = jnp.where(out4 > 0, out4, alpha * out4)                # PReLU
        o_ref[0] = out4.reshape(TH, Wt, Cph).astype(o_ref.dtype)

    return kernel


@functools.partial(jax.jit, static_argnames=("stride", "padding"))
def gen_transpose_block(x_nchw, w1, b1, alpha, w2, b2, *, stride, padding):
    """x_nchw: (N, Cin, H, W).  Returns (N, Cout, H_out, W_out)."""
    N, Cin, H, W = x_nchw.shape
    Cout = w1.shape[1]
    assert w1.shape == (Cin, Cout, K, K)
    s, p = int(stride), int(padding)
    assert s >= 1 and p >= 0           # output_padding is assumed to be 0

    H_out = (H - 1) * s - 2 * p + K
    W_out = (W - 1) * s - 2 * p + K
    assert H_out > 0 and W_out > 0

    # ---- static sub-pixel (phase) decomposition bookkeeping ------------------
    # out[s*ty+ry, s*tx+rx, co] =
    #   sum_{kh: (ry+p-kh)%s==0} sum_{kw: (rx+p-kw)%s==0} sum_ci
    #       x[ty + (ry+p-kh)//s, tx + (rx+p-kw)//s, ci] * w1[ci, co, kh, kw]
    offs = sorted({(r + p - k) // s
                   for r in range(s) for k in range(K) if (r + p - k) % s == 0})
    R = len(offs)
    off_idx = {o: i for i, o in enumerate(offs)}
    q_lo = max(0, -offs[0])

    Ht = -(-H_out // s)                            # output row-groups
    Wt = (-(-W_out // s) + 15) // 16 * 16          # output col-groups (16-aligned)
    TH = Ht if Ht < 8 else 8                       # row-groups per grid step
    T = -(-Ht // TH)
    Ht_pad = T * TH

    Hq = max(Ht_pad + q_lo + offs[-1], q_lo + H)   # padded input rows needed
    Wq = max(Wt + q_lo + offs[-1], q_lo + W)       # padded input cols needed

    Cw = R * Cin                                   # width-tap-folded channels
    Cph = s * s * Cout                             # phase-folded output channels

    # ---- plain-JAX glue: layout plumbing only (no zero-dilation) -------------
    x = jnp.transpose(x_nchw, (0, 2, 3, 1)).astype(jnp.float32)       # NHWC
    x_pad = jnp.pad(x, ((0, 0), (q_lo, Hq - q_lo - H),
                        (q_lo, Wq - q_lo - W), (0, 0)))
    # Fold the width taps into channels ONCE (cheap, ~R x input bytes), so the
    # kernel only ever slices along the major H axis.
    xsh = jnp.concatenate(
        [x_pad[:, :, q_lo + o: q_lo + o + Wt, :] for o in offs],
        axis=-1).astype(jnp.bfloat16)                                 # (N, Hq, Wt, Cw)
    # TODO(synk): for very large H*W*Cin, tile xsh over H with a manual halo DMA
    # instead of keeping the whole (small) folded input resident per batch element.

    # Fused tconv1 weight slabs: (R, Cw, Cph); unused (tap, phase) slots are zero.
    w1f = jnp.zeros((R, Cw, Cph), jnp.float32)
    for ry in range(s):
        for rx in range(s):
            c0 = (ry * s + rx) * Cout
            for kh in range(K):
                if (ry + p - kh) % s:
                    continue
                i = off_idx[(ry + p - kh) // s]
                for kw in range(K):
                    if (rx + p - kw) % s:
                        continue
                    j = off_idx[(rx + p - kw) // s]
                    w1f = w1f.at[i, j * Cin:(j + 1) * Cin,
                                 c0:c0 + Cout].set(w1[:, :, kh, kw])
    w1f = w1f.astype(jnp.bfloat16)

    b1_big = jnp.tile(b1.astype(jnp.float32), s * s).reshape(1, Cph)
    b2_big = jnp.tile(b2.astype(jnp.float32), s * s).reshape(1, Cph)
    w2_big = jnp.kron(jnp.eye(s * s, dtype=jnp.float32),
                      w2[:, :, 0, 0].astype(jnp.float32)).astype(jnp.bfloat16)
    alpha_2d = jnp.asarray(alpha, jnp.float32).reshape(1, 1)

    row_offsets = tuple(q_lo + o for o in offs)
    kernel = _make_kernel(TH, Wt, Cw, Cph, row_offsets)

    y = pl.pallas_call(
        kernel,
        out_shape=jax.ShapeDtypeStruct((N, Ht_pad, Wt, Cph), jnp.float32),
        grid=(N, T),
        in_specs=[
            pl.BlockSpec((1, 1), lambda n, t: (0, 0), memory_space=pltpu.SMEM),  # alpha
            pl.BlockSpec((1, Hq, Wt, Cw), lambda n, t: (n, 0, 0, 0)),            # xsh (resident per n)
            pl.BlockSpec((R, Cw, Cph), lambda n, t: (0, 0, 0)),                  # fused w1
            pl.BlockSpec((1, Cph), lambda n, t: (0, 0)),                         # b1
            pl.BlockSpec((Cph, Cph), lambda n, t: (0, 0)),                       # block-diag w2
            pl.BlockSpec((1, Cph), lambda n, t: (0, 0)),                         # b2
        ],
        out_specs=pl.BlockSpec((1, TH, Wt, Cph), lambda n, t: (n, t, 0, 0)),
        compiler_params=pltpu.CompilerParams(
            dimension_semantics=("parallel", "parallel"),
            vmem_limit_bytes=32 * 1024 * 1024),
    )(alpha_2d, xsh, w1f, b1_big, w2_big, b2_big)

    # Un-fold the phases: (n, ty, tx, ry, rx, co) -> (n, s*ty+ry, s*tx+rx, co) -> NCHW
    y = y.reshape(N, Ht_pad, Wt, s, s, Cout)
    y = jnp.transpose(y, (0, 1, 3, 2, 4, 5)).reshape(N, Ht_pad * s, Wt * s, Cout)
    y = y[:, :H_out, :W_out, :]
    return jnp.transpose(y, (0, 3, 1, 2))


def ref_forward(x, w1, b1, alpha, w2, b2, stride, padding):
    """Pure numpy transcription of the PyTorch module (definition of ConvTranspose2d)."""
    x = np.asarray(x, np.float32)
    w1 = np.asarray(w1, np.float32); b1 = np.asarray(b1, np.float32)
    w2 = np.asarray(w2, np.float32); b2 = np.asarray(b2, np.float32)
    alpha = float(alpha)
    N, Cin, H, W = x.shape
    Cout = w1.shape[1]
    Hf = (H - 1) * stride + K
    Wf = (W - 1) * stride + K
    full = np.zeros((N, Cout, Hf, Wf), np.float32)
    for kh in range(K):
        for kw in range(K):
            contrib = np.einsum('nchw,co->nohw', x, w1[:, :, kh, kw])
            full[:, :, kh:kh + (H - 1) * stride + 1:stride,
                       kw:kw + (W - 1) * stride + 1:stride] += contrib
    H_out = (H - 1) * stride - 2 * padding + K
    W_out = (W - 1) * stride - 2 * padding + K
    out1 = full[:, :, padding:padding + H_out, padding:padding + W_out] + b1[None, :, None, None]
    out2 = np.where(out1 > 0, out1, alpha * out1)
    out3 = np.einsum('nchw,co->nohw', out2, w2[:, :, 0, 0]) + b2[None, :, None, None]
    out4 = out1 + out3
    out4 = np.where(out4 > 0, out4, alpha * out4)
    return out4


if __name__ == "__main__":
    # small deterministic config
    N, in_c, H, W = 2, 4, 16, 16
    out_c, stride, padding = 8, 2, 1

    key = jax.random.PRNGKey(0)
    k1, k2, k3, k4, kx = jax.random.split(key, 5)
    # parameter shapes per nn.ConvTranspose2d: (in_channels, out_channels, kH, kW)
    w1 = jax.random.normal(k1, (in_c, out_c, K, K), jnp.float32) * 0.1
    b1 = jax.random.normal(k2, (out_c,), jnp.float32) * 0.1
    w2 = jax.random.normal(k3, (out_c, out_c, 1, 1), jnp.float32) * 0.1
    b2 = jax.random.normal(k4, (out_c,), jnp.float32) * 0.1
    alpha = 0.25  # nn.PReLU() default (single shared parameter)

    x = jax.random.normal(kx, (N, in_c, H, W), jnp.float32)

    out = gen_transpose_block(x, w1, b1, alpha, w2, b2, stride=stride, padding=padding)
    out = jax.block_until_ready(out)

    ref = ref_forward(x, w1, b1, alpha, w2, b2, stride, padding)
    assert out.shape == ref.shape, (out.shape, ref.shape)
    # bf16 MXU operands with f32 accumulation -> slightly looser tolerance
    np.testing.assert_allclose(np.asarray(out), ref, rtol=2e-2, atol=2e-2)
    print("KERNEL_OK")
</pallas_src>

<mosaic_0001>
module attributes {stable_mosaic.version = 11 : i64} {
  func.func @kernel(%arg0: i32, %arg1: i32, %arg2: memref<1x1xf32, #tpu.memory_space<smem>>, %arg3: memref<1x18x16x12xbf16, #tpu.memory_space<vmem>>, %arg4: memref<3x12x32xbf16, #tpu.memory_space<vmem>>, %arg5: memref<1x32xf32, #tpu.memory_space<vmem>>, %arg6: memref<32x32xbf16, #tpu.memory_space<vmem>>, %arg7: memref<1x32xf32, #tpu.memory_space<vmem>>, %arg8: memref<1x8x16x32xf32, #tpu.memory_space<vmem>>) attributes {dimension_semantics = [#tpu.dimension_semantics<parallel>, #tpu.dimension_semantics<parallel>], iteration_bounds = array<i64: 2, 2>, scalar_prefetch = 0 : i64, scratch_operands = 0 : i64, tpu.core_type = #tpu.core_type<tc>, window_params = [{transform_indices = @transform_0, window_bounds = array<i64: 1, 1>}, {transform_indices = @transform_1, window_bounds = array<i64: 1, 18, 16, 12>}, {pipeline_mode = #tpu.pipeline_mode<synchronous>, transform_indices = @transform_2, window_bounds = array<i64: 3, 12, 32>}, {pipeline_mode = #tpu.pipeline_mode<synchronous>, transform_indices = @transform_3, window_bounds = array<i64: 1, 32>}, {pipeline_mode = #tpu.pipeline_mode<synchronous>, transform_indices = @transform_4, window_bounds = array<i64: 32, 32>}, {pipeline_mode = #tpu.pipeline_mode<synchronous>, transform_indices = @transform_5, window_bounds = array<i64: 1, 32>}, {transform_indices = @transform_6, window_bounds = array<i64: 1, 8, 16, 32>}]} {
    %c8_i32 = arith.constant 8 : i32
    %0 = arith.muli %arg1, %c8_i32 : i32
    %c0_i32 = arith.constant 0 : i32
    %1 = arith.addi %0, %c0_i32 : i32
    %c0 = arith.constant 0 : index
    %2 = arith.index_cast %1 : i32 to index
    %c0_0 = arith.constant 0 : index
    %c0_1 = arith.constant 0 : index
    %3 = vector.load %arg3[%c0, %2, %c0_0, %c0_1] : memref<1x18x16x12xbf16, #tpu.memory_space<vmem>>, vector<1x8x16x12xbf16>
    %4 = vector.shape_cast %3 : vector<1x8x16x12xbf16> to vector<8x16x12xbf16>
    %5 = vector.shape_cast %4 : vector<8x16x12xbf16> to vector<128x12xbf16>
    %c0_2 = arith.constant 0 : index
    %c0_3 = arith.constant 0 : index
    %c0_4 = arith.constant 0 : index
    %6 = vector.load %arg4[%c0_2, %c0_3, %c0_4] : memref<3x12x32xbf16, #tpu.memory_space<vmem>>, vector<1x12x32xbf16>
    %7 = vector.shape_cast %6 : vector<1x12x32xbf16> to vector<12x32xbf16>
    %cst = arith.constant dense<0.000000e+00> : vector<128x32xf32>
    %8 = tpu.matmul %5, %7, %cst {dimension_numbers = #tpu.dot_dimension_numbers<[1], [0], [0], [1], [0, 0, 1, 1], [], []>} : vector<128x12xbf16>, vector<12x32xbf16>, vector<128x32xf32> -> vector<128x32xf32>
    %c1_i32 = arith.constant 1 : i32
    %9 = arith.addi %0, %c1_i32 : i32
    %c0_5 = arith.constant 0 : index
    %10 = arith.index_cast %9 : i32 to index
    %c0_6 = arith.constant 0 : index
    %c0_7 = arith.constant 0 : index
    %11 = vector.load %arg3[%c0_5, %10, %c0_6, %c0_7] : memref<1x18x16x12xbf16, #tpu.memory_space<vmem>>, vector<1x8x16x12xbf16>
    %12 = vector.shape_cast %11 : vector<1x8x16x12xbf16> to vector<8x16x12xbf16>
    %13 = vector.shape_cast %12 : vector<8x16x12xbf16> to vector<128x12xbf16>
    %c1 = arith.constant 1 : index
    %c0_8 = arith.constant 0 : index
    %c0_9 = arith.constant 0 : index
    %14 = vector.load %arg4[%c1, %c0_8, %c0_9] : memref<3x12x32xbf16, #tpu.memory_space<vmem>>, vector<1x12x32xbf16>
    %15 = vector.shape_cast %14 : vector<1x12x32xbf16> to vector<12x32xbf16>
    %cst_10 = arith.constant dense<0.000000e+00> : vector<128x32xf32>
    %16 = tpu.matmul %13, %15, %cst_10 {dimension_numbers = #tpu.dot_dimension_numbers<[1], [0], [0], [1], [0, 0, 1, 1], [], []>} : vector<128x12xbf16>, vector<12x32xbf16>, vector<128x32xf32> -> vector<128x32xf32>
    %17 = arith.addf %8, %16 : vector<128x32xf32>
    %c2_i32 = arith.constant 2 : i32
    %18 = arith.addi %0, %c2_i32 : i32
    %c0_11 = arith.constant 0 : index
    %19 = arith.index_cast %18 : i32 to index
    %c0_12 = arith.constant 0 : index
    %c0_13 = arith.constant 0 : index
    %20 = vector.load %arg3[%c0_11, %19, %c0_12, %c0_13] : memref<1x18x16x12xbf16, #tpu.memory_space<vmem>>, vector<1x8x16x12xbf16>
    %21 = vector.shape_cast %20 : vector<1x8x16x12xbf16> to vector<8x16x12xbf16>
    %22 = vector.shape_cast %21 : vector<8x16x12xbf16> to vector<128x12xbf16>
    %c2 = arith.constant 2 : index
    %c0_14 = arith.constant 0 : index
    %c0_15 = arith.constant 0 : index
    %23 = vector.load %arg4[%c2, %c0_14, %c0_15] : memref<3x12x32xbf16, #tpu.memory_space<vmem>>, vector<1x12x32xbf16>
    %24 = vector.shape_cast %23 : vector<1x12x32xbf16> to vector<12x32xbf16>
    %cst_16 = arith.constant dense<0.000000e+00> : vector<128x32xf32>
    %25 = tpu.matmul %22, %24, %cst_16 {dimension_numbers = #tpu.dot_dimension_numbers<[1], [0], [0], [1], [0, 0, 1, 1], [], []>} : vector<128x12xbf16>, vector<12x32xbf16>, vector<128x32xf32> -> vector<128x32xf32>
    %26 = arith.addf %17, %25 : vector<128x32xf32>
    %c0_17 = arith.constant 0 : index
    %c0_18 = arith.constant 0 : index
    %27 = memref.load %arg2[%c0_17, %c0_18] : memref<1x1xf32, #tpu.memory_space<smem>>
    %c0_19 = arith.constant 0 : index
    %c0_20 = arith.constant 0 : index
    %28 = vector.load %arg5[%c0_19, %c0_20] : memref<1x32xf32, #tpu.memory_space<vmem>>, vector<1x32xf32>
    %29 = vector.broadcast %28 : vector<1x32xf32> to vector<128x32xf32>
    %30 = arith.addf %26, %29 : vector<128x32xf32>
    %cst_21 = arith.constant 0.000000e+00 : f32
    %31 = vector.broadcast %cst_21 : f32 to vector<128x32xf32>
    %32 = arith.cmpf ogt, %30, %31 : vector<128x32xf32>
    %33 = vector.broadcast %27 : f32 to vector<128x32xf32>
    %34 = arith.mulf %33, %30 : vector<128x32xf32>
    %35 = arith.select %32, %30, %34 : vector<128x32xi1>, vector<128x32xf32>
    %36 = arith.truncf %35 : vector<128x32xf32> to vector<128x32xbf16>
    %c0_22 = arith.constant 0 : index
    %c0_23 = arith.constant 0 : index
    %37 = vector.load %arg6[%c0_22, %c0_23] : memref<32x32xbf16, #tpu.memory_space<vmem>>, vector<32x32xbf16>
    %cst_24 = arith.constant dense<0.000000e+00> : vector<128x32xf32>
    %38 = tpu.matmul %36, %37, %cst_24 {dimension_numbers = #tpu.dot_dimension_numbers<[1], [0], [0], [1], [0, 0, 1, 1], [], []>} : vector<128x32xbf16>, vector<32x32xbf16>, vector<128x32xf32> -> vector<128x32xf32>
    %39 = arith.addf %30, %38 : vector<128x32xf32>
    %c0_25 = arith.constant 0 : index
    %c0_26 = arith.constant 0 : index
    %40 = vector.load %arg7[%c0_25, %c0_26] : memref<1x32xf32, #tpu.memory_space<vmem>>, vector<1x32xf32>
    %41 = vector.broadcast %40 : vector<1x32xf32> to vector<128x32xf32>
    %42 = arith.addf %39, %41 : vector<128x32xf32>
    %cst_27 = arith.constant 0.000000e+00 : f32
    %43 = vector.broadcast %cst_27 : f32 to vector<128x32xf32>
    %44 = arith.cmpf ogt, %42, %43 : vector<128x32xf32>
    %45 = vector.broadcast %27 : f32 to vector<128x32xf32>
    %46 = arith.mulf %45, %42 : vector<128x32xf32>
    %47 = arith.select %44, %42, %46 : vector<128x32xi1>, vector<128x32xf32>
    %48 = vector.shape_cast %47 : vector<128x32xf32> to vector<8x16x32xf32>
    %c0_28 = arith.constant 0 : index
    %c0_29 = arith.constant 0 : index
    %c0_30 = arith.constant 0 : index
    %c0_31 = arith.constant 0 : index
    %49 = vector.load %arg8[%c0_28, %c0_29, %c0_30, %c0_31] : memref<1x8x16x32xf32, #tpu.memory_space<vmem>>, vector<1x8x16x32xf32>
    %50 = vector.shape_cast %49 : vector<1x8x16x32xf32> to vector<8x16x32xf32>
    %51 = vector.shape_cast %48 : vector<8x16x32xf32> to vector<1x8x16x32xf32>
    tpu.vector_store %arg8[%c0_28, %c0_29, %c0_30, %c0_31], %51 {strides = array<i32>} : memref<1x8x16x32xf32, #tpu.memory_space<vmem>>, vector<1x8x16x32xf32>,
    return
  }
  func.func @transform_0(%arg0: i32, %arg1: i32) -> (i32, i32) {
    %c0_i32 = arith.constant 0 : i32
    %c0_i32_0 = arith.constant 0 : i32
    %c0_i32_1 = arith.constant 0 : i32
    return %c0_i32, %c0_i32_0 : i32, i32
  }
  func.func @transform_1(%arg0: i32, %arg1: i32) -> (i32, i32, i32, i32) {
    %c0_i32 = arith.constant 0 : i32
    %c0_i32_0 = arith.constant 0 : i32
    %c0_i32_1 = arith.constant 0 : i32
    %c0_i32_2 = arith.constant 0 : i32
    return %arg0, %c0_i32, %c0_i32_0, %c0_i32_1 : i32, i32, i32, i32
  }
  func.func @transform_2(%arg0: i32, %arg1: i32) -> (i32, i32, i32) {
    %c0_i32 = arith.constant 0 : i32
    %c0_i32_0 = arith.constant 0 : i32
    %c0_i32_1 = arith.constant 0 : i32
    %c0_i32_2 = arith.constant 0 : i32
    return %c0_i32, %c0_i32_0, %c0_i32_1 : i32, i32, i32
  }
  func.func @transform_3(%arg0: i32, %arg1: i32) -> (i32, i32) {
    %c0_i32 = arith.constant 0 : i32
    %c0_i32_0 = arith.constant 0 : i32
    %c0_i32_1 = arith.constant 0 : i32
    return %c0_i32, %c0_i32_0 : i32, i32
  }
  func.func @transform_4(%arg0: i32, %arg1: i32) -> (i32, i32) {
    %c0_i32 = arith.constant 0 : i32
    %c0_i32_0 = arith.constant 0 : i32
    %c0_i32_1 = arith.constant 0 : i32
    return %c0_i32, %c0_i32_0 : i32, i32
  }
  func.func @transform_5(%arg0: i32, %arg1: i32) -> (i32, i32) {
    %c0_i32 = arith.constant 0 : i32
    %c0_i32_0 = arith.constant 0 : i32
    %c0_i32_1 = arith.constant 0 : i32
    return %c0_i32, %c0_i32_0 : i32, i32
  }
  func.func @transform_6(%arg0: i32, %arg1: i32) -> (i32, i32, i32, i32) {
    %c0_i32 = arith.constant 0 : i32
    %c0_i32_0 = arith.constant 0 : i32
    %c0_i32_1 = arith.constant 0 : i32
    return %arg0, %arg1, %c0_i32, %c0_i32_0 : i32, i32, i32, i32
  }
}

</mosaic_0001>

<llo_original>
// kernel: tile.13
$region0: #{tile.13}
  #allocation0 [shape = 's32[1]{0}', space=sflag, size = 0x4, scoped, tag = 'scoped memory for tile.13']
  %s0 = inlined_call_operand.vmem [shape: f32[8], index: 0, kind: input, shape index: {}]
  %s1 = inlined_call_operand.vmem [shape: f32[4,8], index: 1, kind: output, shape index: {}]
  // Predicated region
  $region2: #{tile.13} parent=0 // pred_check
    _
  $region3: #{tile.13} parent=0 // pred_check_branch
    %3 = sbr.rel (0) target = $region5
  $region4: #{tile.13} parent=0 // pred_region
    _
  $region5: #{tile.13} parent=0 // pred_fallthru
    _
  %v4 = vld [vmem:[%s0] ss:$0 sm:$0xff]
  %5 = vst [vmem:[%s1] sm:$0xf] %v4

// kernel: tile.14
$region0: #{tile.14}
  %s0 = inlined_call_operand.vmem [shape: f32[4,8], index: 0, kind: input, shape index: {}]
  %s1 = inlined_call_operand.vmem [shape: f32[1,32], index: 1, kind: output, shape index: {}]
  $region1: #{tile.14} parent=0
    #allocation0 [shape = 'u8[4096]{0}', space=vmem, size = 0x1000, scoped, tag = 'scoped mem for output reshape']
    #allocation1 [shape = 'u8[4096]{0}', space=vmem, size = 0x1000, scoped, tag = 'scoped mem for input reshape']
    %s3 = sshll.u32 1, 4
    %s4 = ssub.s32 %s3, 1
    %v5 = vld [vmem:[%s0] sm:%s4]
    %6 = vst [vmem:[#allocation1] sm:%s4] %v5
    %v7 = vld [vmem:[#allocation1] sm:$0x1]
    %vm8 = vcmask 64512
    %9 = vst.msk [vmem:[#allocation0] sm:$0x1] %vm8, %v7
    %s10 = scalar_lea.vmem [#allocation1], 3
    %v11 = vld [vmem:[%s10] sm:$0x1]
    %12 = vrot.lane.b32.xlu0 %v11, 24
    %v13 = vpop.permute.xlu0 %12
    %vm14 = vcmask 261312
    %15 = vst.msk [vmem:[#allocation0] sm:$0x1] %vm14, %v13
    %s16 = scalar_lea.vmem [#allocation1], 2
    %v17 = vld [vmem:[%s16] sm:$0x1]
    %18 = vrot.lane.b32.xlu0 %v17, 16
    %v19 = vpop.permute.xlu0 %18
    %vm20 = vcmask 195712
    %21 = vst.msk [vmem:[#allocation0] sm:$0x1] %vm20, %v19
    %s22 = scalar_lea.vmem [#allocation1], 1
    %v23 = vld [vmem:[%s22] sm:$0x1]
    %24 = vrot.lane.b32.xlu0 %v23, 8
    %v25 = vpop.permute.xlu0 %24
    %vm26 = vcmask 130112
    %27 = vst.msk [vmem:[#allocation0] sm:$0x1] %vm26, %v25
    %s29 = sshll.u32 1, 1
    %s30 = ssub.s32 %s29, 1
    %v32 = vld [vmem:[#allocation0] sm:%s30]
    %s33 = sshll.u32 1, 1
    %s34 = ssub.s32 %s33, 1
    %35 = vst [vmem:[%s1] sm:%s34] %v32

// kernel: gen_transpose_block.1
$region0: #{gen_transpose_block.1}
  #allocation0 [shape = 'u32[]', space=smem, size = 0x4, offset = 0x4, fixed_abs, tag = 'smem constant byte address 0x4 - core index']
  #allocation1 [shape = 'u32[144,128]{1,0:T(1,128)}', space=vmem, size = 0x12000, scoped, tag = 'internal scratch']
  #allocation2 [shape = 'f32[1,1]{1,0:T(1,128)S(6)}', space=smem, size = 0x200, scoped, tag = 'scoped memory for gen_transpose_block.1']
  %s0 = inlined_call_operand.<no memory space> [shape: f32[1,1], index: 0, kind: input, shape index: {}]
  %s1 = inlined_call_operand.vmem [shape: bf16[2,18,16,12], index: 1, kind: input, shape index: {}]
  %s2 = inlined_call_operand.vmem [shape: bf16[3,12,32], index: 2, kind: input, shape index: {}]
  %s3 = inlined_call_operand.vmem [shape: f32[1,32], index: 3, kind: input, shape index: {}]
  %s4 = inlined_call_operand.vmem [shape: bf16[32,32], index: 4, kind: input, shape index: {}]
  %s5 = inlined_call_operand.vmem [shape: f32[1,32], index: 5, kind: input, shape index: {}]
  %s6 = inlined_call_operand.vmem [shape: f32[2,16,16,32], index: 6, kind: output, shape index: {}]
  %s7 = sld [smem:[#allocation0]]
  $region57: #{gen_transpose_block.1} parent=0
    _
  %s9 = ssub.s32 1, %s7
  %s10 = scalar_select 0, %s9, %s7
  %11 = sst [smem:[#allocation2]] %s0
  loop: start=0, step=1, limit=6
  $region2: #{gen_transpose_block.1} parent=0 // loop_pre_header
    _
  $region3: #{gen_transpose_block.1} parent=0 // loop_header
    %s13 = sphi 0, %s17
    %p14 = scmp.ge.s32.totalorder %s13, 6
    %s20 = sphi 0, %s32
    %s21 = sphi 0, %s28
    %s22 = sphi 0, %s20
    %s23 = sphi 0, %s21
    %s24 = sphi 0, %s22
    %s25 = sphi 0, %s23
    %s33 = sphi 0, %s33
    %s35 = sphi 0, %s33
    %s36 = sphi 0, %s35
    %s50 = sphi 0, %s36
    %s56 = sphi 0, %s58
    %s59 = sphi 0, %s56
    %s60 = sphi 0, %s59
    %s76 = sphi 0, %s60
    %s80 = sphi 0, %s80
    %s82 = sphi 0, %s80
    %s83 = sphi 0, %s82
    %s97 = sphi 0, %s83
    %s101 = sphi 0, %s101
    %s103 = sphi 0, %s101
    %s104 = sphi 0, %s103
    %s118 = sphi 0, %s104
    %s122 = sphi 0, %s122
    %s124 = sphi 0, %s122
    %s125 = sphi 0, %s124
    %s139 = sphi 0, %s125
    %s143 = sphi 0, %s143
    %s145 = sphi 0, %s143
    %s146 = sphi 0, %s145
    %s160 = sphi 0, %s146
    %s168 = sphi 0, %s170
    %s171 = sphi 0, %s168
    %s172 = sphi 0, %s171
    %s188 = sphi 0, %s172
  $region4: #{gen_transpose_block.1} parent=0 // loop_header_branch
    %16 = sbr.rel (%p14) target = $region8
  $region5: #{gen_transpose_block.1} parent=0 // loop_body
    %s18 = ssub.s32 %s13, 1
    %s19 = ssub.s32 %s13, 2
    %s26 = sadd.s32 1, %s21
    %p27 = scmp.ge.s32.totalorder %s26, 2
    %s28 = scalar_select %p27, 0, %s26
    %s29 = sadd.s32 1, %s20
    %s30 = scalar_select %p27, %s29, %s20
    %p31 = scmp.ge.s32.totalorder %s30, 2
    %s32 = scalar_select %p31, 0, %s30
    %s34 = sadd.s32 %s33, 1
    %p37 = scmp.eq.s32.totalorder %s13, 3
    %p38 = scmp.ne.s32.totalorder %s33, %s35
    %p39 = scmp.eq.s32.totalorder %s13, 0
    %p40 = por %p38, %p39
    %p41 = scmp.ne.s32.totalorder %s33, %s35
    %p42 = scmp.eq.s32.totalorder %s18, 3
    %p43 = por %p41, %p42
    %p44 = scmp.ne.s32.totalorder %s35, %s36
    %p45 = scmp.eq.s32.totalorder %s18, 0
    %p46 = por %p44, %p45
    %p47 = scmp.ne.s32.totalorder %s35, %s36
    %p48 = scmp.eq.s32.totalorder %s19, 3
    %p49 = por %p47, %p48
    %p51 = scmp.ne.s32.totalorder %s36, %s50
    %p52 = scmp.eq.s32.totalorder %s19, 0
    %p53 = por %p51, %p52
    %s54 = ssub.s32 %s20, %s32
    %p55 = scmp.eq.s32.totalorder %s54, 0
    %s57 = sadd.s32 %s56, 1
    %s58 = scalar_select %p55, %s56, %s57
    %p61 = pneg %p55
    %p62 = scmp.eq.s32.totalorder %s13, 3
    %p63 = por %p61, %p62
    %p64 = scmp.ne.s32.totalorder %s56, %s59
    %p65 = scmp.eq.s32.totalorder %s13, 0
    %p66 = por %p64, %p65
    %p67 = scmp.ne.s32.totalorder %s56, %s59
    %p68 = scmp.eq.s32.totalorder %s18, 3
    %p69 = por %p67, %p68
    %p70 = scmp.ne.s32.totalorder %s59, %s60
    %p71 = scmp.eq.s32.totalorder %s18, 0
    %p72 = por %p70, %p71
    %p73 = scmp.ne.s32.totalorder %s59, %s60
    %p74 = scmp.eq.s32.totalorder %s19, 3
    %p75 = por %p73, %p74
    %p77 = scmp.ne.s32.totalorder %s60, %s76
    %p78 = scmp.eq.s32.totalorder %s19, 0
    %p79 = por %p77, %p78
    %s81 = sadd.s32 %s80, 1
    %p84 = scmp.eq.s32.totalorder %s13, 3
    %p85 = scmp.ne.s32.totalorder %s80, %s82
    %p86 = scmp.eq.s32.totalorder %s13, 0
    %p87 = por %p85, %p86
    %p88 = scmp.ne.s32.totalorder %s80, %s82
    %p89 = scmp.eq.s32.totalorder %s18, 3
    %p90 = por %p88, %p89
    %p91 = scmp.ne.s32.totalorder %s82, %s83
    %p92 = scmp.eq.s32.totalorder %s18, 0
    %p93 = por %p91, %p92
    %p94 = scmp.ne.s32.totalorder %s82, %s83
    %p95 = scmp.eq.s32.totalorder %s19, 3
    %p96 = por %p94, %p95
    %p98 = scmp.ne.s32.totalorder %s83, %s97
    %p99 = scmp.eq.s32.totalorder %s19, 0
    %p100 = por %p98, %p99
    %s102 = sadd.s32 %s101, 1
    %p105 = scmp.eq.s32.totalorder %s13, 3
    %p106 = scmp.ne.s32.totalorder %s101, %s103
    %p107 = scmp.eq.s32.totalorder %s13, 0
    %p108 = por %p106, %p107
    %p109 = scmp.ne.s32.totalorder %s101, %s103
    %p110 = scmp.eq.s32.totalorder %s18, 3
    %p111 = por %p109, %p110
    %p112 = scmp.ne.s32.totalorder %s103, %s104
    %p113 = scmp.eq.s32.totalorder %s18, 0
    %p114 = por %p112, %p113
    %p115 = scmp.ne.s32.totalorder %s103, %s104
    %p116 = scmp.eq.s32.totalorder %s19, 3
    %p117 = por %p115, %p116
    %p119 = scmp.ne.s32.totalorder %s104, %s118
    %p120 = scmp.eq.s32.totalorder %s19, 0
    %p121 = por %p119, %p120
    %s123 = sadd.s32 %s122, 1
    %p126 = scmp.eq.s32.totalorder %s13, 3
    %p127 = scmp.ne.s32.totalorder %s122, %s124
    %p128 = scmp.eq.s32.totalorder %s13, 0
    %p129 = por %p127, %p128
    %p130 = scmp.ne.s32.totalorder %s122, %s124
    %p131 = scmp.eq.s32.totalorder %s18, 3
    %p132 = por %p130, %p131
    %p133 = scmp.ne.s32.totalorder %s124, %s125
    %p134 = scmp.eq.s32.totalorder %s18, 0
    %p135 = por %p133, %p134
    %p136 = scmp.ne.s32.totalorder %s124, %s125
    %p137 = scmp.eq.s32.totalorder %s19, 3
    %p138 = por %p136, %p137
    %p140 = scmp.ne.s32.totalorder %s125, %s139
    %p141 = scmp.eq.s32.totalorder %s19, 0
    %p142 = por %p140, %p141
    %s144 = sadd.s32 %s143, 1
    %p147 = scmp.eq.s32.totalorder %s13, 3
    %p148 = scmp.ne.s32.totalorder %s143, %s145
    %p149 = scmp.eq.s32.totalorder %s13, 0
    %p150 = por %p148, %p149
    %p151 = scmp.ne.s32.totalorder %s143, %s145
    %p152 = scmp.eq.s32.totalorder %s18, 3
    %p153 = por %p151, %p152
    %p154 = scmp.ne.s32.totalorder %s145, %s146
    %p155 = scmp.eq.s32.totalorder %s18, 0
    %p156 = por %p154, %p155
    %p157 = scmp.ne.s32.totalorder %s145, %s146
    %p158 = scmp.eq.s32.totalorder %s19, 3
    %p159 = por %p157, %p158
    %p161 = scmp.ne.s32.totalorder %s146, %s160
    %p162 = scmp.eq.s32.totalorder %s19, 0
    %p163 = por %p161, %p162
    %s164 = ssub.s32 %s20, %s32
    %s165 = ssub.s32 %s21, %s28
    %s166 = sor.u32 %s164, %s165
    %p167 = scmp.eq.s32.totalorder %s166, 0
    %s169 = sadd.s32 %s168, 1
    %s170 = scalar_select %p167, %s168, %s169
    %p173 = pneg %p167
    %p174 = scmp.eq.s32.totalorder %s13, 3
    %p175 = por %p173, %p174
    %p176 = scmp.ne.s32.totalorder %s168, %s171
    %p177 = scmp.eq.s32.totalorder %s13, 0
    %p178 = por %p176, %p177
    %p179 = scmp.ne.s32.totalorder %s168, %s171
    %p180 = scmp.eq.s32.totalorder %s18, 3
    %p181 = por %p179, %p180
    %p182 = scmp.ne.s32.totalorder %s171, %s172
    %p183 = scmp.eq.s32.totalorder %s18, 0
    %p184 = por %p182, %p183
    %p185 = scmp.ne.s32.totalorder %s171, %s172
    %p186 = scmp.eq.s32.totalorder %s19, 3
    %p187 = por %p185, %p186
    %p189 = scmp.ne.s32.totalorder %s172, %s188
    %p190 = scmp.eq.s32.totalorder %s19, 0
    %p191 = por %p189, %p190
    %p192 = scmp.le.s32.totalorder 1, %s13
    %p193 = scmp.lt.s32.totalorder %s13, 5
    %p194 = pnand %p192, %p193
    %p195 = pneg %p194
    // Predicated region
    $region9: #{gen_transpose_block.1} parent=5 // pred_check
      _
    $region10: #{gen_transpose_block.1} parent=5 // pred_check_branch
      %197 = sbr.rel (%p194) target = $region12
    $region11: #{gen_transpose_block.1} parent=5 // pred_region
      %s198 = ssub.s32 %s13, 1
      // Predicated region
      $region13: #{gen_transpose_block.1} parent=11 // pred_check
        %p199 = pneg %p46
      $region14: #{gen_transpose_block.1} parent=11 // pred_check_branch
        %201 = sbr.rel (%p199) target = $region16
      $region15: #{gen_transpose_block.1} parent=11 // pred_region
        _
      $region16: #{gen_transpose_block.1} parent=11 // pred_fallthru
        _
      // Predicated region
      $region17: #{gen_transpose_block.1} parent=11 // pred_check
        %p202 = pneg %p93
      $region18: #{gen_transpose_block.1} parent=11 // pred_check_branch
        %204 = sbr.rel (%p202) target = $region20
      $region19: #{gen_transpose_block.1} parent=11 // pred_region
        _
      $region20: #{gen_transpose_block.1} parent=11 // pred_fallthru
        _
      // Predicated region
      $region21: #{gen_transpose_block.1} parent=11 // pred_check
        %p205 = pneg %p114
      $region22: #{gen_transpose_block.1} parent=11 // pred_check_branch
        %207 = sbr.rel (%p205) target = $region24
      $region23: #{gen_transpose_block.1} parent=11 // pred_region
        _
      $region24: #{gen_transpose_block.1} parent=11 // pred_fallthru
        _
      // Predicated region
      $region25: #{gen_transpose_block.1} parent=11 // pred_check
        %p208 = pneg %p135
      $region26: #{gen_transpose_block.1} parent=11 // pred_check_branch
        %210 = sbr.rel (%p208) target = $region28
      $region27: #{gen_transpose_block.1} parent=11 // pred_region
        _
      $region28: #{gen_transpose_block.1} parent=11 // pred_fallthru
        _
      // Predicated region
      $region29: #{gen_transpose_block.1} parent=11 // pred_check
        %p211 = pneg %p156
      $region30: #{gen_transpose_block.1} parent=11 // pred_check_branch
        %213 = sbr.rel (%p211) target = $region32
      $region31: #{gen_transpose_block.1} parent=11 // pred_region
        _
      $region32: #{gen_transpose_block.1} parent=11 // pred_fallthru
        _
    $region12: #{gen_transpose_block.1} parent=5 // pred_fallthru
      _
    %p214 = scmp.lt.s32.totalorder %s13, 4
    // Predicated region
    $region33: #{gen_transpose_block.1} parent=5 // pred_check
      %p215 = pneg %p214
    $region34: #{gen_transpose_block.1} parent=5 // pred_check_branch
      %217 = sbr.rel (%p215) target = $region36
    $region35: #{gen_transpose_block.1} parent=5 // pred_region
      // Predicated region
      $region37: #{gen_transpose_block.1} parent=35 // pred_check
        %p218 = pneg %p66
      $region38: #{gen_transpose_block.1} parent=35 // pred_check_branch
        %220 = sbr.rel (%p218) target = $region40
      $region39: #{gen_transpose_block.1} parent=35 // pred_region
        %p221 = scmp.lt.s32.totalorder %s20, 1
        %s222 = scalar_select %p221, %s20, 1
        %s223 = smul.addr %s222, 36
        %s224 = smul.addr %s223, 4
        %s225 = scalar_lea.vmem %s1, %s224
      $region40: #{gen_transpose_block.1} parent=35 // pred_fallthru
        _
    $region36: #{gen_transpose_block.1} parent=5 // pred_fallthru
      _
    %p226 = scmp.le.s32.totalorder 1, %s13
    %p227 = scmp.lt.s32.totalorder %s13, 5
    %p228 = pnand %p226, %p227
    %p229 = pneg %p228
    // Predicated region
    $region41: #{gen_transpose_block.1} parent=5 // pred_check
      _
    $region42: #{gen_transpose_block.1} parent=5 // pred_check_branch
      %231 = sbr.rel (%p228) target = $region44
    $region43: #{gen_transpose_block.1} parent=5 // pred_region
      %s232 = ssub.s32 %s13, 1
      %p233 = pneg %p46
      %p234 = pneg %p43
      %p235 = scmp.lt.s32.totalorder %s22, 1
      %s236 = scalar_select %p235, %s22, 1
      %s237 = smul.addr %s236, 36
      %s238 = smul.addr %s237, 4
      %s239 = scalar_lea.vmem %s1, %s238
      %p240 = pneg %p72
      %p241 = pneg %p69
      %p242 = pneg %p93
      %p243 = pneg %p90
      %p244 = pneg %p114
      %p245 = pneg %p111
      %p246 = pneg %p135
      %p247 = pneg %p132
      %p248 = pneg %p156
      %p249 = pneg %p153
      %p250 = pneg %p184
      %p251 = pneg %p181
      %s252 = smul.u32 8, %s23
      %p253 = scmp.lt.s32.totalorder %s22, 1
      %s254 = scalar_select %p253, %s22, 1
      %p255 = scmp.lt.s32.totalorder %s252, 15
      %s256 = scalar_select %p255, %s252, 15
      %s257 = smul.addr %s256, 2
      %s258 = smul.addr %s254, 32
      %s259 = sadd.s32 %s257, %s258
      %s260 = smul.addr %s259, 8
      %s261 = scalar_lea.vmem %s6, %s260
      %p262 = scmp.lt.s32.totalorder %s22, 1
      %s263 = scalar_select %p262, %s22, 1
      %s264 = smul.addr %s263, 36
      %s265 = smul.addr %s264, 4
      %s266 = scalar_lea.vmem %s1, %s265
      %s267 = smul.u32 8, %s23
      %p268 = scmp.lt.s32.totalorder %s22, 1
      %s269 = scalar_select %p268, %s22, 1
      %p270 = scmp.lt.s32.totalorder %s267, 15
      %s271 = scalar_select %p270, %s267, 15
      %s272 = smul.addr %s271, 2
      %s273 = smul.addr %s269, 32
      %s274 = sadd.s32 %s272, %s273
      %s275 = smul.addr %s274, 8
      %s276 = scalar_lea.vmem %s6, %s275
      %s277 = smul.u32 8, %s23
      %s279 = smul.u32 %s23, 8
      %s280 = smul.u32 %s279, 2
      %s281 = smul.addr %s280, 4
      %s282 = scalar_lea.vmem %s266, %s281
      %v283 = vld [vmem:[%s282] sm:$0xf]
      %v284 = vld [vmem:[%s282 + $0x4] sm:$0xf]
      %v285 = vld [vmem:[%s282 + $0x8] sm:$0xf]
      %v286 = vld [vmem:[%s282 + $0xc] sm:$0xf]
      %v287 = vld [vmem:[%s282 + $0x10] sm:$0xf]
      %v288 = vld [vmem:[%s282 + $0x14] sm:$0xf]
      %v289 = vld [vmem:[%s282 + $0x18] sm:$0xf]
      %v290 = vld [vmem:[%s282 + $0x1c] sm:$0xf]
      %v291 = vld [vmem:[%s282 + $0x20] sm:$0xf]
      %v292 = vld [vmem:[%s282 + $0x24] sm:$0xf]
      %v293 = vld [vmem:[%s282 + $0x28] sm:$0xf]
      %v294 = vld [vmem:[%s282 + $0x2c] sm:$0xf]
      %v295 = vld [vmem:[%s282 + $0x30] sm:$0xf]
      %v296 = vld [vmem:[%s282 + $0x34] sm:$0xf]
      %v297 = vld [vmem:[%s282 + $0x38] sm:$0xf]
      %v298 = vld [vmem:[%s282 + $0x3c] sm:$0xf]
      %v299 = vld [vmem:[%s2] sm:$0xf]
      %v300 = vld [vmem:[%s2 + $0x4] sm:$0x3]
      %s301 = sadd.s32 %s279, 1
      %s302 = smul.u32 %s301, 2
      %s303 = smul.addr %s302, 4
      %s304 = scalar_lea.vmem %s266, %s303
      %v305 = vld [vmem:[%s304] sm:$0xf]
      %v306 = vld [vmem:[%s304 + $0x4] sm:$0xf]
      %v307 = vld [vmem:[%s304 + $0x8] sm:$0xf]
      %v308 = vld [vmem:[%s304 + $0xc] sm:$0xf]
      %v309 = vld [vmem:[%s304 + $0x10] sm:$0xf]
      %v310 = vld [vmem:[%s304 + $0x14] sm:$0xf]
      %v311 = vld [vmem:[%s304 + $0x18] sm:$0xf]
      %v312 = vld [vmem:[%s304 + $0x1c] sm:$0xf]
      %v313 = vld [vmem:[%s304 + $0x20] sm:$0xf]
      %v314 = vld [vmem:[%s304 + $0x24] sm:$0xf]
      %v315 = vld [vmem:[%s304 + $0x28] sm:$0xf]
      %v316 = vld [vmem:[%s304 + $0x2c] sm:$0xf]
      %v317 = vld [vmem:[%s304 + $0x30] sm:$0xf]
      %v318 = vld [vmem:[%s304 + $0x34] sm:$0xf]
      %v319 = vld [vmem:[%s304 + $0x38] sm:$0xf]
      %v320 = vld [vmem:[%s304 + $0x3c] sm:$0xf]
      %s321 = scalar_lea.vmem %s2, 8
      %v322 = vld [vmem:[%s321] sm:$0xf]
      %v323 = vld [vmem:[%s321 + $0x4] sm:$0x3]
      %v340 = vunpack.c.l.b16 %v305
      %v341 = vunpack.c.l.b16 %v306
      %v342 = vunpack.c.l.b16 %v307
      %v343 = vunpack.c.l.b16 %v308
      %v344 = vunpack.c.l.b16 %v309
      %v345 = vunpack.c.l.b16 %v310
      %v346 = vunpack.c.l.b16 %v311
      %v347 = vunpack.c.l.b16 %v312
      %v348 = vunpack.c.l.b16 %v313
      %v349 = vunpack.c.l.b16 %v314
      %v350 = vunpack.c.l.b16 %v315
      %v351 = vunpack.c.l.b16 %v316
      %v352 = vunpack.c.l.b16 %v317
      %v353 = vunpack.c.l.b16 %v318
      %v354 = vunpack.c.l.b16 %v319
      %v355 = vunpack.c.l.b16 %v320
      %v356 = vpack.c.b16 %v341, %v340
      %v357 = vpack.c.b16 %v343, %v342
      %v358 = vpack.c.b16 %v345, %v344
      %v359 = vpack.c.b16 %v347, %v346
      %v360 = vpack.c.b16 %v349, %v348
      %v361 = vpack.c.b16 %v351, %v350
      %v362 = vpack.c.b16 %v353, %v352
      %v363 = vpack.c.b16 %v355, %v354
      %v366 = vunpack.c.l.b16 %v322
      %v367 = vunpack.c.l.b16 %v323
      %v368 = vpack.c.b16 %v367, %v366
      %vm369 = vcmask 97280
      %v371 = vsel %vm369, %v356, 0
      %v374 = vsel %vm369, %v357, 0
      %v377 = vsel %vm369, %v358, 0
      %v380 = vsel %vm369, %v359, 0
      %v383 = vsel %vm369, %v360, 0
      %v386 = vsel %vm369, %v361, 0
      %v389 = vsel %vm369, %v362, 0
      %v392 = vsel %vm369, %v363, 0
      %vm394 = vcmask 1045504
      %v396 = vsel %vm394, %v368, 0
      %398 = vmatprep.subr.bf16.mxu0 0
      %399 = vmatpush1.bf16.msra.mxu0 0
      %400 = vmatprep.subr.bf16.mxu0 0
      %401 = vmatpush1.bf16.msra.mxu0 0
      %402 = vmatprep.subr.bf16.mxu0 0
      %403 = vmatpush1.bf16.msra.mxu0 0
      %404 = vmatprep.subr.bf16.mxu0 0
      %405 = vmatpush1.bf16.msra.mxu0 0
      %406 = vmatprep.subr.bf16.mxu0 0
      %407 = vmatpush1.bf16.msra.mxu0 0
      %408 = vmatprep.subr.bf16.mxu0 0
      %409 = vmatpush1.bf16.msra.mxu0 0
      %410 = vmatprep.subr.bf16.mxu0 0
      %411 = vmatpush1.bf16.msra.mxu0 0
      %412 = vmatprep.subr.bf16.mxu0 0
      %413 = vmatpush1.bf16.msra.mxu0 %v396
      %414 = vmatprep.subr.bf16.mxu0 0
      %415 = vmatpush2.bf16.msra.mxu0 0
      %416 = vmatprep.subr.bf16.mxu0 0
      %417 = vmatpush2.bf16.msra.mxu0 0
      %418 = vmatprep.subr.bf16.mxu0 0
      %419 = vmatpush2.bf16.msra.mxu0 0
      %420 = vmatprep.subr.bf16.mxu0 0
      %421 = vmatpush2.bf16.msra.mxu0 0
      %422 = vmatprep.subr.bf16.mxu0 0
      %423 = vmatpush2.bf16.msra.mxu0 0
      %424 = vmatprep.subr.bf16.mxu0 0
      %425 = vmatpush2.bf16.msra.mxu0 0
      %426 = vmatprep.subr.bf16.mxu0 0
      %427 = vmatpush2.bf16.msra.mxu0 0
      %428 = vmatprep.subr.bf16.mxu0 0
      %429 = vmatpush2.bf16.msra.mxu0 0
      %430 = vmatprep.mubr.bf16.mxu0 0
      %431 = vmatmul.mubr.bf16.gmra.mxu0 %v371
      %v432 = vpop.f32.mrf.mxu0
      %v433 = vadd.f32 0.0, %v432
      %v434 = vpop.f32.mrf.mxu0
      %v435 = vpop.f32.mrf.mxu0
      %v436 = vadd.f32 0.0, %v435
      %v437 = vpop.f32.mrf.mxu0
      %438 = vmatprep.mubr.bf16.mxu0 0
      %439 = vmatmul.mubr.bf16.gmra.mxu0 %v374
      %v440 = vpop.f32.mrf.mxu0
      %v441 = vadd.f32 0.0, %v440
      %v442 = vpop.f32.mrf.mxu0
      %v443 = vpop.f32.mrf.mxu0
      %v444 = vadd.f32 0.0, %v443
      %v445 = vpop.f32.mrf.mxu0
      %446 = vmatprep.mubr.bf16.mxu0 0
      %447 = vmatmul.mubr.bf16.gmra.mxu0 %v377
      %v448 = vpop.f32.mrf.mxu0
      %v449 = vadd.f32 0.0, %v448
      %v450 = vpop.f32.mrf.mxu0
      %v451 = vpop.f32.mrf.mxu0
      %v452 = vadd.f32 0.0, %v451
      %v453 = vpop.f32.mrf.mxu0
      %454 = vmatprep.mubr.bf16.mxu0 0
      %455 = vmatmul.mubr.bf16.gmra.mxu0 %v380
      %v456 = vpop.f32.mrf.mxu0
      %v457 = vadd.f32 0.0, %v456
      %v458 = vpop.f32.mrf.mxu0
      %v459 = vpop.f32.mrf.mxu0
      %v460 = vadd.f32 0.0, %v459
      %v461 = vpop.f32.mrf.mxu0
      %462 = vmatprep.mubr.bf16.mxu0 0
      %463 = vmatmul.mubr.bf16.gmra.mxu0 %v383
      %v464 = vpop.f32.mrf.mxu0
      %v465 = vadd.f32 0.0, %v464
      %v466 = vpop.f32.mrf.mxu0
      %v467 = vpop.f32.mrf.mxu0
      %v468 = vadd.f32 0.0, %v467
      %v469 = vpop.f32.mrf.mxu0
      %470 = vmatprep.mubr.bf16.mxu0 0
      %471 = vmatmul.mubr.bf16.gmra.mxu0 %v386
      %v472 = vpop.f32.mrf.mxu0
      %v473 = vadd.f32 0.0, %v472
      %v474 = vpop.f32.mrf.mxu0
      %v475 = vpop.f32.mrf.mxu0
      %v476 = vadd.f32 0.0, %v475
      %v477 = vpop.f32.mrf.mxu0
      %478 = vmatprep.mubr.bf16.mxu0 0
      %479 = vmatmul.mubr.bf16.gmra.mxu0 %v389
      %v480 = vpop.f32.mrf.mxu0
      %v481 = vadd.f32 0.0, %v480
      %v482 = vpop.f32.mrf.mxu0
      %v483 = vpop.f32.mrf.mxu0
      %v484 = vadd.f32 0.0, %v483
      %v485 = vpop.f32.mrf.mxu0
      %486 = vmatprep.mubr.bf16.mxu0 0
      %487 = vmatmul.mubr.bf16.gmra.mxu0 %v392
      %v488 = vpop.f32.mrf.mxu0
      %v489 = vadd.f32 0.0, %v488
      %v490 = vpop.f32.mrf.mxu0
      %v491 = vpop.f32.mrf.mxu0
      %v492 = vadd.f32 0.0, %v491
      %v493 = vpop.f32.mrf.mxu0
      %494 = vdwg.mxu0
      %v511 = vunpack.c.l.b16 %v283
      %v512 = vunpack.c.l.b16 %v284
      %v513 = vunpack.c.l.b16 %v285
      %v514 = vunpack.c.l.b16 %v286
      %v515 = vunpack.c.l.b16 %v287
      %v516 = vunpack.c.l.b16 %v288
      %v517 = vunpack.c.l.b16 %v289
      %v518 = vunpack.c.l.b16 %v290
      %v519 = vunpack.c.l.b16 %v291
      %v520 = vunpack.c.l.b16 %v292
      %v521 = vunpack.c.l.b16 %v293
      %v522 = vunpack.c.l.b16 %v294
      %v523 = vunpack.c.l.b16 %v295
      %v524 = vunpack.c.l.b16 %v296
      %v525 = vunpack.c.l.b16 %v297
      %v526 = vunpack.c.l.b16 %v298
      %v527 = vpack.c.b16 %v512, %v511
      %v528 = vpack.c.b16 %v514, %v513
      %v529 = vpack.c.b16 %v516, %v515
      %v530 = vpack.c.b16 %v518, %v517
      %v531 = vpack.c.b16 %v520, %v519
      %v532 = vpack.c.b16 %v522, %v521
      %v533 = vpack.c.b16 %v524, %v523
      %v534 = vpack.c.b16 %v526, %v525
      %v537 = vunpack.c.l.b16 %v299
      %v538 = vunpack.c.l.b16 %v300
      %v539 = vpack.c.b16 %v538, %v537
      %v541 = vsel %vm369, %v527, 0
      %v544 = vsel %vm369, %v528, 0
      %v547 = vsel %vm369, %v529, 0
      %v550 = vsel %vm369, %v530, 0
      %v553 = vsel %vm369, %v531, 0
      %v556 = vsel %vm369, %v532, 0
      %v559 = vsel %vm369, %v533, 0
      %v562 = vsel %vm369, %v534, 0
      %v565 = vsel %vm394, %v539, 0
      %567 = vmatprep.subr.bf16.mxu0 0
      %568 = vmatpush1.bf16.msra.mxu0 0
      %569 = vmatprep.subr.bf16.mxu0 0
      %570 = vmatpush1.bf16.msra.mxu0 0
      %571 = vmatprep.subr.bf16.mxu0 0
      %572 = vmatpush1.bf16.msra.mxu0 0
      %573 = vmatprep.subr.bf16.mxu0 0
      %574 = vmatpush1.bf16.msra.mxu0 0
      %575 = vmatprep.subr.bf16.mxu0 0
      %576 = vmatpush1.bf16.msra.mxu0 0
      %577 = vmatprep.subr.bf16.mxu0 0
      %578 = vmatpush1.bf16.msra.mxu0 0
      %579 = vmatprep.subr.bf16.mxu0 0
      %580 = vmatpush1.bf16.msra.mxu0 0
      %581 = vmatprep.subr.bf16.mxu0 0
      %582 = vmatpush1.bf16.msra.mxu0 %v565
      %583 = vmatprep.subr.bf16.mxu0 0
      %584 = vmatpush2.bf16.msra.mxu0 0
      %585 = vmatprep.subr.bf16.mxu0 0
      %586 = vmatpush2.bf16.msra.mxu0 0
      %587 = vmatprep.subr.bf16.mxu0 0
      %588 = vmatpush2.bf16.msra.mxu0 0
      %589 = vmatprep.subr.bf16.mxu0 0
      %590 = vmatpush2.bf16.msra.mxu0 0
      %591 = vmatprep.subr.bf16.mxu0 0
      %592 = vmatpush2.bf16.msra.mxu0 0
      %593 = vmatprep.subr.bf16.mxu0 0
      %594 = vmatpush2.bf16.msra.mxu0 0
      %595 = vmatprep.subr.bf16.mxu0 0
      %596 = vmatpush2.bf16.msra.mxu0 0
      %597 = vmatprep.subr.bf16.mxu0 0
      %598 = vmatpush2.bf16.msra.mxu0 0
      %599 = vmatprep.mubr.bf16.mxu0 0
      %600 = vmatmul.mubr.bf16.gmra.mxu0 %v541
      %v601 = vpop.f32.mrf.mxu0
      %v602 = vadd.f32 %v433, %v601
      %v603 = vpop.f32.mrf.mxu0
      %v604 = vpop.f32.mrf.mxu0
      %v605 = vadd.f32 %v436, %v604
      %v606 = vpop.f32.mrf.mxu0
      %607 = vmatprep.mubr.bf16.mxu0 0
      %608 = vmatmul.mubr.bf16.gmra.mxu0 %v544
      %v609 = vpop.f32.mrf.mxu0
      %v610 = vadd.f32 %v441, %v609
      %v611 = vpop.f32.mrf.mxu0
      %v612 = vpop.f32.mrf.mxu0
      %v613 = vadd.f32 %v444, %v612
      %v614 = vpop.f32.mrf.mxu0
      %615 = vmatprep.mubr.bf16.mxu0 0
      %616 = vmatmul.mubr.bf16.gmra.mxu0 %v547
      %v617 = vpop.f32.mrf.mxu0
      %v618 = vadd.f32 %v449, %v617
      %v619 = vpop.f32.mrf.mxu0
      %v620 = vpop.f32.mrf.mxu0
      %v621 = vadd.f32 %v452, %v620
      %v622 = vpop.f32.mrf.mxu0
      %623 = vmatprep.mubr.bf16.mxu0 0
      %624 = vmatmul.mubr.bf16.gmra.mxu0 %v550
      %v625 = vpop.f32.mrf.mxu0
      %v626 = vadd.f32 %v457, %v625
      %v627 = vpop.f32.mrf.mxu0
      %v628 = vpop.f32.mrf.mxu0
      %v629 = vadd.f32 %v460, %v628
      %v630 = vpop.f32.mrf.mxu0
      %631 = vmatprep.mubr.bf16.mxu0 0
      %632 = vmatmul.mubr.bf16.gmra.mxu0 %v553
      %v633 = vpop.f32.mrf.mxu0
      %v634 = vadd.f32 %v465, %v633
      %v635 = vpop.f32.mrf.mxu0
      %v636 = vpop.f32.mrf.mxu0
      %v637 = vadd.f32 %v468, %v636
      %v638 = vpop.f32.mrf.mxu0
      %639 = vmatprep.mubr.bf16.mxu0 0
      %640 = vmatmul.mubr.bf16.gmra.mxu0 %v556
      %v641 = vpop.f32.mrf.mxu0
      %v642 = vadd.f32 %v473, %v641
      %v643 = vpop.f32.mrf.mxu0
      %v644 = vpop.f32.mrf.mxu0
      %v645 = vadd.f32 %v476, %v644
      %v646 = vpop.f32.mrf.mxu0
      %647 = vmatprep.mubr.bf16.mxu0 0
      %648 = vmatmul.mubr.bf16.gmra.mxu0 %v559
      %v649 = vpop.f32.mrf.mxu0
      %v650 = vadd.f32 %v481, %v649
      %v651 = vpop.f32.mrf.mxu0
      %v652 = vpop.f32.mrf.mxu0
      %v653 = vadd.f32 %v484, %v652
      %v654 = vpop.f32.mrf.mxu0
      %655 = vmatprep.mubr.bf16.mxu0 0
      %656 = vmatmul.mubr.bf16.gmra.mxu0 %v562
      %v657 = vpop.f32.mrf.mxu0
      %v658 = vadd.f32 %v489, %v657
      %v659 = vpop.f32.mrf.mxu0
      %v660 = vpop.f32.mrf.mxu0
      %v661 = vadd.f32 %v492, %v660
      %v662 = vpop.f32.mrf.mxu0
      %663 = vdwg.mxu0
      %s664 = sadd.s32 %s279, 2
      %s665 = smul.u32 %s664, 2
      %s666 = smul.addr %s665, 4
      %s667 = scalar_lea.vmem %s266, %s666
      %v668 = vld [vmem:[%s667] sm:$0xf]
      %v669 = vld [vmem:[%s667 + $0x4] sm:$0xf]
      %v670 = vld [vmem:[%s667 + $0x8] sm:$0xf]
      %v671 = vld [vmem:[%s667 + $0xc] sm:$0xf]
      %v672 = vld [vmem:[%s667 + $0x10] sm:$0xf]
      %v673 = vld [vmem:[%s667 + $0x14] sm:$0xf]
      %v674 = vld [vmem:[%s667 + $0x18] sm:$0xf]
      %v675 = vld [vmem:[%s667 + $0x1c] sm:$0xf]
      %v676 = vld [vmem:[%s667 + $0x20] sm:$0xf]
      %v677 = vld [vmem:[%s667 + $0x24] sm:$0xf]
      %v678 = vld [vmem:[%s667 + $0x28] sm:$0xf]
      %v679 = vld [vmem:[%s667 + $0x2c] sm:$0xf]
      %v680 = vld [vmem:[%s667 + $0x30] sm:$0xf]
      %v681 = vld [vmem:[%s667 + $0x34] sm:$0xf]
      %v682 = vld [vmem:[%s667 + $0x38] sm:$0xf]
      %v683 = vld [vmem:[%s667 + $0x3c] sm:$0xf]
      %s684 = scalar_lea.vmem %s2, 16
      %v685 = vld [vmem:[%s684] sm:$0xf]
      %v686 = vld [vmem:[%s684 + $0x4] sm:$0x3]
      %v703 = vunpack.c.l.b16 %v668
      %v704 = vunpack.c.l.b16 %v669
      %v705 = vunpack.c.l.b16 %v670
      %v706 = vunpack.c.l.b16 %v671
      %v707 = vunpack.c.l.b16 %v672
      %v708 = vunpack.c.l.b16 %v673
      %v709 = vunpack.c.l.b16 %v674
      %v710 = vunpack.c.l.b16 %v675
      %v711 = vunpack.c.l.b16 %v676
      %v712 = vunpack.c.l.b16 %v677
      %v713 = vunpack.c.l.b16 %v678
      %v714 = vunpack.c.l.b16 %v679
      %v715 = vunpack.c.l.b16 %v680
      %v716 = vunpack.c.l.b16 %v681
      %v717 = vunpack.c.l.b16 %v682
      %v718 = vunpack.c.l.b16 %v683
      %v719 = vpack.c.b16 %v704, %v703
      %v720 = vpack.c.b16 %v706, %v705
      %v721 = vpack.c.b16 %v708, %v707
      %v722 = vpack.c.b16 %v710, %v709
      %v723 = vpack.c.b16 %v712, %v711
      %v724 = vpack.c.b16 %v714, %v713
      %v725 = vpack.c.b16 %v716, %v715
      %v726 = vpack.c.b16 %v718, %v717
      %v729 = vunpack.c.l.b16 %v685
      %v730 = vunpack.c.l.b16 %v686
      %v731 = vpack.c.b16 %v730, %v729
      %v733 = vsel %vm369, %v719, 0
      %v736 = vsel %vm369, %v720, 0
      %v739 = vsel %vm369, %v721, 0
      %v742 = vsel %vm369, %v722, 0
      %v745 = vsel %vm369, %v723, 0
      %v748 = vsel %vm369, %v724, 0
      %v751 = vsel %vm369, %v725, 0
      %v754 = vsel %vm369, %v726, 0
      %v757 = vsel %vm394, %v731, 0
      %759 = vmatprep.subr.bf16.mxu0 0
      %760 = vmatpush1.bf16.msra.mxu0 0
      %761 = vmatprep.subr.bf16.mxu0 0
      %762 = vmatpush1.bf16.msra.mxu0 0
      %763 = vmatprep.subr.bf16.mxu0 0
      %764 = vmatpush1.bf16.msra.mxu0 0
      %765 = vmatprep.subr.bf16.mxu0 0
      %766 = vmatpush1.bf16.msra.mxu0 0
      %767 = vmatprep.subr.bf16.mxu0 0
      %768 = vmatpush1.bf16.msra.mxu0 0
      %769 = vmatprep.subr.bf16.mxu0 0
      %770 = vmatpush1.bf16.msra.mxu0 0
      %771 = vmatprep.subr.bf16.mxu0 0
      %772 = vmatpush1.bf16.msra.mxu0 0
      %773 = vmatprep.subr.bf16.mxu0 0
      %774 = vmatpush1.bf16.msra.mxu0 %v757
      %775 = vmatprep.subr.bf16.mxu0 0
      %776 = vmatpush2.bf16.msra.mxu0 0
      %777 = vmatprep.subr.bf16.mxu0 0
      %778 = vmatpush2.bf16.msra.mxu0 0
      %779 = vmatprep.subr.bf16.mxu0 0
      %780 = vmatpush2.bf16.msra.mxu0 0
      %781 = vmatprep.subr.bf16.mxu0 0
      %782 = vmatpush2.bf16.msra.mxu0 0
      %783 = vmatprep.subr.bf16.mxu0 0
      %784 = vmatpush2.bf16.msra.mxu0 0
      %785 = vmatprep.subr.bf16.mxu0 0
      %786 = vmatpush2.bf16.msra.mxu0 0
      %787 = vmatprep.subr.bf16.mxu0 0
      %788 = vmatpush2.bf16.msra.mxu0 0
      %789 = vmatprep.subr.bf16.mxu0 0
      %790 = vmatpush2.bf16.msra.mxu0 0
      %791 = vmatprep.mubr.bf16.mxu0 0
      %792 = vmatmul.mubr.bf16.gmra.mxu0 %v733
      %v793 = vpop.f32.mrf.mxu0
      %v794 = vadd.f32 0.0, %v793
      %v795 = vpop.f32.mrf.mxu0
      %v796 = vpop.f32.mrf.mxu0
      %v797 = vadd.f32 0.0, %v796
      %v798 = vpop.f32.mrf.mxu0
      %799 = vmatprep.mubr.bf16.mxu0 0
      %800 = vmatmul.mubr.bf16.gmra.mxu0 %v736
      %v801 = vpop.f32.mrf.mxu0
      %v802 = vadd.f32 0.0, %v801
      %v803 = vpop.f32.mrf.mxu0
      %v804 = vpop.f32.mrf.mxu0
      %v805 = vadd.f32 0.0, %v804
      %v806 = vpop.f32.mrf.mxu0
      %807 = vmatprep.mubr.bf16.mxu0 0
      %808 = vmatmul.mubr.bf16.gmra.mxu0 %v739
      %v809 = vpop.f32.mrf.mxu0
      %v810 = vadd.f32 0.0, %v809
      %v811 = vpop.f32.mrf.mxu0
      %v812 = vpop.f32.mrf.mxu0
      %v813 = vadd.f32 0.0, %v812
      %v814 = vpop.f32.mrf.mxu0
      %815 = vmatprep.mubr.bf16.mxu0 0
      %816 = vmatmul.mubr.bf16.gmra.mxu0 %v742
      %v817 = vpop.f32.mrf.mxu0
      %v818 = vadd.f32 0.0, %v817
      %v819 = vpop.f32.mrf.mxu0
      %v820 = vpop.f32.mrf.mxu0
      %v821 = vadd.f32 0.0, %v820
      %v822 = vpop.f32.mrf.mxu0
      %823 = vmatprep.mubr.bf16.mxu0 0
      %824 = vmatmul.mubr.bf16.gmra.mxu0 %v745
      %v825 = vpop.f32.mrf.mxu0
      %v826 = vadd.f32 0.0, %v825
      %v827 = vpop.f32.mrf.mxu0
      %v828 = vpop.f32.mrf.mxu0
      %v829 = vadd.f32 0.0, %v828
      %v830 = vpop.f32.mrf.mxu0
      %831 = vmatprep.mubr.bf16.mxu0 0
      %832 = vmatmul.mubr.bf16.gmra.mxu0 %v748
      %v833 = vpop.f32.mrf.mxu0
      %v834 = vadd.f32 0.0, %v833
      %v835 = vpop.f32.mrf.mxu0
      %v836 = vpop.f32.mrf.mxu0
      %v837 = vadd.f32 0.0, %v836
      %v838 = vpop.f32.mrf.mxu0
      %839 = vmatprep.mubr.bf16.mxu0 0
      %840 = vmatmul.mubr.bf16.gmra.mxu0 %v751
      %v841 = vpop.f32.mrf.mxu0
      %v842 = vadd.f32 0.0, %v841
      %v843 = vpop.f32.mrf.mxu0
      %v844 = vpop.f32.mrf.mxu0
      %v845 = vadd.f32 0.0, %v844
      %v846 = vpop.f32.mrf.mxu0
      %847 = vmatprep.mubr.bf16.mxu0 0
      %848 = vmatmul.mubr.bf16.gmra.mxu0 %v754
      %v849 = vpop.f32.mrf.mxu0
      %v850 = vadd.f32 0.0, %v849
      %v851 = vpop.f32.mrf.mxu0
      %v852 = vpop.f32.mrf.mxu0
      %v853 = vadd.f32 0.0, %v852
      %v854 = vpop.f32.mrf.mxu0
      %855 = vdwg.mxu0
      %v856 = vadd.f32 %v602, %v794
      %v857 = vadd.f32 %v605, %v797
      %v858 = vadd.f32 %v610, %v802
      %v859 = vadd.f32 %v613, %v805
      %v860 = vadd.f32 %v618, %v810
      %v861 = vadd.f32 %v621, %v813
      %v862 = vadd.f32 %v626, %v818
      %v863 = vadd.f32 %v629, %v821
      %v864 = vadd.f32 %v634, %v826
      %v865 = vadd.f32 %v637, %v829
      %v866 = vadd.f32 %v642, %v834
      %v867 = vadd.f32 %v645, %v837
      %v868 = vadd.f32 %v650, %v842
      %v869 = vadd.f32 %v653, %v845
      %v870 = vadd.f32 %v658, %v850
      %v871 = vadd.f32 %v661, %v853
      %s872 = sld [smem:[#allocation2]]
      %v873 = vld [vmem:[%s3] sm:$0x1]
      %v875 = vlaneseq
      %v876 = vshrl.u32 %v875, 7
      %v877 = vsub.s32 0, %v876
      %v878 = vrot.slane %v873, %v877
      %v880 = vadd.f32 %v856, %v878
      %v881 = vadd.f32 %v857, %v878
      %v882 = vadd.f32 %v858, %v878
      %v883 = vadd.f32 %v859, %v878
      %v884 = vadd.f32 %v860, %v878
      %v885 = vadd.f32 %v861, %v878
      %v886 = vadd.f32 %v862, %v878
      %v887 = vadd.f32 %v863, %v878
      %v888 = vadd.f32 %v864, %v878
      %v889 = vadd.f32 %v865, %v878
      %v890 = vadd.f32 %v866, %v878
      %v891 = vadd.f32 %v867, %v878
      %v892 = vadd.f32 %v868, %v878
      %v893 = vadd.f32 %v869, %v878
      %v894 = vadd.f32 %v870, %v878
      %v895 = vadd.f32 %v871, %v878
      %vm896 = vcmp.gt.f32.partialorder %v880, 0.0
      %vm897 = vcmp.gt.f32.partialorder %v881, 0.0
      %vm898 = vcmp.gt.f32.partialorder %v882, 0.0
      %vm899 = vcmp.gt.f32.partialorder %v883, 0.0
      %vm900 = vcmp.gt.f32.partialorder %v884, 0.0
      %vm901 = vcmp.gt.f32.partialorder %v885, 0.0
      %vm902 = vcmp.gt.f32.partialorder %v886, 0.0
      %vm903 = vcmp.gt.f32.partialorder %v887, 0.0
      %vm904 = vcmp.gt.f32.partialorder %v888, 0.0
      %vm905 = vcmp.gt.f32.partialorder %v889, 0.0
      %vm906 = vcmp.gt.f32.partialorder %v890, 0.0
      %vm907 = vcmp.gt.f32.partialorder %v891, 0.0
      %vm908 = vcmp.gt.f32.partialorder %v892, 0.0
      %vm909 = vcmp.gt.f32.partialorder %v893, 0.0
      %vm910 = vcmp.gt.f32.partialorder %v894, 0.0
      %vm911 = vcmp.gt.f32.partialorder %v895, 0.0
      %v912 = vstv %s872
      %v913 = vmul.f32 %v912, %v880
      %v914 = vmul.f32 %v912, %v881
      %v915 = vmul.f32 %v912, %v882
      %v916 = vmul.f32 %v912, %v883
      %v917 = vmul.f32 %v912, %v884
      %v918 = vmul.f32 %v912, %v885
      %v919 = vmul.f32 %v912, %v886
      %v920 = vmul.f32 %v912, %v887
      %v921 = vmul.f32 %v912, %v888
      %v922 = vmul.f32 %v912, %v889
      %v923 = vmul.f32 %v912, %v890
      %v924 = vmul.f32 %v912, %v891
      %v925 = vmul.f32 %v912, %v892
      %v926 = vmul.f32 %v912, %v893
      %v927 = vmul.f32 %v912, %v894
      %v928 = vmul.f32 %v912, %v895
      %v929 = vsel %vm896, %v880, %v913
      %v930 = vsel %vm897, %v881, %v914
      %v931 = vsel %vm898, %v882, %v915
      %v932 = vsel %vm899, %v883, %v916
      %v933 = vsel %vm900, %v884, %v917
      %v934 = vsel %vm901, %v885, %v918
      %v935 = vsel %vm902, %v886, %v919
      %v936 = vsel %vm903, %v887, %v920
      %v937 = vsel %vm904, %v888, %v921
      %v938 = vsel %vm905, %v889, %v922
      %v939 = vsel %vm906, %v890, %v923
      %v940 = vsel %vm907, %v891, %v924
      %v941 = vsel %vm908, %v892, %v925
      %v942 = vsel %vm909, %v893, %v926
      %v943 = vsel %vm910, %v894, %v927
      %v944 = vsel %vm911, %v895, %v928
      %v945 = vpack.c.bf16 %v930, %v929
      %v946 = vpack.c.bf16 %v932, %v931
      %v947 = vpack.c.bf16 %v934, %v933
      %v948 = vpack.c.bf16 %v936, %v935
      %v949 = vpack.c.bf16 %v938, %v937
      %v950 = vpack.c.bf16 %v940, %v939
      %v951 = vpack.c.bf16 %v942, %v941
      %v952 = vpack.c.bf16 %v944, %v943
      %v953 = vld [vmem:[%s4] sm:$0xf]
      %v954 = vld [vmem:[%s4 + $0x4] sm:$0xf]
      %v955 = vld [vmem:[%s4 + $0x8] sm:$0xf]
      %v956 = vld [vmem:[%s4 + $0xc] sm:$0xf]
      %v961 = vunpack.c.l.b16 %v953
      %v962 = vunpack.c.l.b16 %v954
      %v963 = vunpack.c.l.b16 %v955
      %v964 = vunpack.c.l.b16 %v956
      %v965 = vpack.c.b16 %v962, %v961
      %v966 = vpack.c.b16 %v964, %v963
      %vm969 = vcmask 261120
      %v971 = vsel %vm969, %v945, 0
      %v974 = vsel %vm969, %v946, 0
      %v977 = vsel %vm969, %v947, 0
      %v980 = vsel %vm969, %v948, 0
      %v983 = vsel %vm969, %v949, 0
      %v986 = vsel %vm969, %v950, 0
      %v989 = vsel %vm969, %v951, 0
      %v992 = vsel %vm969, %v952, 0
      %994 = vmatprep.subr.bf16.mxu0 0
      %995 = vmatpush1.bf16.msra.mxu0 0
      %996 = vmatprep.subr.bf16.mxu0 0
      %997 = vmatpush1.bf16.msra.mxu0 0
      %998 = vmatprep.subr.bf16.mxu0 0
      %999 = vmatpush1.bf16.msra.mxu0 0
      %1000 = vmatprep.subr.bf16.mxu0 0
      %1001 = vmatpush1.bf16.msra.mxu0 0
      %1002 = vmatprep.subr.bf16.mxu0 0
      %1003 = vmatpush1.bf16.msra.mxu0 0
      %1004 = vmatprep.subr.bf16.mxu0 0
      %1005 = vmatpush1.bf16.msra.mxu0 0
      %1006 = vmatprep.subr.bf16.mxu0 0
      %1007 = vmatpush1.bf16.msra.mxu0 %v966
      %1008 = vmatprep.subr.bf16.mxu0 0
      %1009 = vmatpush1.bf16.msra.mxu0 %v965
      %1010 = vmatprep.subr.bf16.mxu0 0
      %1011 = vmatpush2.bf16.msra.mxu0 0
      %1012 = vmatprep.subr.bf16.mxu0 0
      %1013 = vmatpush2.bf16.msra.mxu0 0
      %1014 = vmatprep.subr.bf16.mxu0 0
      %1015 = vmatpush2.bf16.msra.mxu0 0
      %1016 = vmatprep.subr.bf16.mxu0 0
      %1017 = vmatpush2.bf16.msra.mxu0 0
      %1018 = vmatprep.subr.bf16.mxu0 0
      %1019 = vmatpush2.bf16.msra.mxu0 0
      %1020 = vmatprep.subr.bf16.mxu0 0
      %1021 = vmatpush2.bf16.msra.mxu0 0
      %1022 = vmatprep.subr.bf16.mxu0 0
      %1023 = vmatpush2.bf16.msra.mxu0 0
      %1024 = vmatprep.subr.bf16.mxu0 0
      %1025 = vmatpush2.bf16.msra.mxu0 0
      %1026 = vmatprep.mubr.bf16.mxu0 0
      %1027 = vmatmul.mubr.bf16.gmra.mxu0 %v971
      %v1028 = vpop.f32.mrf.mxu0
      %v1029 = vadd.f32 0.0, %v1028
      %v1030 = vpop.f32.mrf.mxu0
      %v1031 = vpop.f32.mrf.mxu0
      %v1032 = vadd.f32 0.0, %v1031
      %v1033 = vpop.f32.mrf.mxu0
      %1034 = vmatprep.mubr.bf16.mxu0 0
      %1035 = vmatmul.mubr.bf16.gmra.mxu0 %v974
      %v1036 = vpop.f32.mrf.mxu0
      %v1037 = vadd.f32 0.0, %v1036
      %v1038 = vpop.f32.mrf.mxu0
      %v1039 = vpop.f32.mrf.mxu0
      %v1040 = vadd.f32 0.0, %v1039
      %v1041 = vpop.f32.mrf.mxu0
      %1042 = vmatprep.mubr.bf16.mxu0 0
      %1043 = vmatmul.mubr.bf16.gmra.mxu0 %v977
      %v1044 = vpop.f32.mrf.mxu0
      %v1045 = vadd.f32 0.0, %v1044
      %v1046 = vpop.f32.mrf.mxu0
      %v1047 = vpop.f32.mrf.mxu0
      %v1048 = vadd.f32 0.0, %v1047
      %v1049 = vpop.f32.mrf.mxu0
      %1050 = vmatprep.mubr.bf16.mxu0 0
      %1051 = vmatmul.mubr.bf16.gmra.mxu0 %v980
      %v1052 = vpop.f32.mrf.mxu0
      %v1053 = vadd.f32 0.0, %v1052
      %v1054 = vpop.f32.mrf.mxu0
      %v1055 = vpop.f32.mrf.mxu0
      %v1056 = vadd.f32 0.0, %v1055
      %v1057 = vpop.f32.mrf.mxu0
      %1058 = vmatprep.mubr.bf16.mxu0 0
      %1059 = vmatmul.mubr.bf16.gmra.mxu0 %v983
      %v1060 = vpop.f32.mrf.mxu0
      %v1061 = vadd.f32 0.0, %v1060
      %v1062 = vpop.f32.mrf.mxu0
      %v1063 = vpop.f32.mrf.mxu0
      %v1064 = vadd.f32 0.0, %v1063
      %v1065 = vpop.f32.mrf.mxu0
      %1066 = vmatprep.mubr.bf16.mxu0 0
      %1067 = vmatmul.mubr.bf16.gmra.mxu0 %v986
      %v1068 = vpop.f32.mrf.mxu0
      %v1069 = vadd.f32 0.0, %v1068
      %v1070 = vpop.f32.mrf.mxu0
      %v1071 = vpop.f32.mrf.mxu0
      %v1072 = vadd.f32 0.0, %v1071
      %v1073 = vpop.f32.mrf.mxu0
      %1074 = vmatprep.mubr.bf16.mxu0 0
      %1075 = vmatmul.mubr.bf16.gmra.mxu0 %v989
      %v1076 = vpop.f32.mrf.mxu0
      %v1077 = vadd.f32 0.0, %v1076
      %v1078 = vpop.f32.mrf.mxu0
      %v1079 = vpop.f32.mrf.mxu0
      %v1080 = vadd.f32 0.0, %v1079
      %v1081 = vpop.f32.mrf.mxu0
      %1082 = vmatprep.mubr.bf16.mxu0 0
      %1083 = vmatmul.mubr.bf16.gmra.mxu0 %v992
      %v1084 = vpop.f32.mrf.mxu0
      %v1085 = vadd.f32 0.0, %v1084
      %v1086 = vpop.f32.mrf.mxu0
      %v1087 = vpop.f32.mrf.mxu0
      %v1088 = vadd.f32 0.0, %v1087
      %v1089 = vpop.f32.mrf.mxu0
      %1090 = vdwg.mxu0
      %v1091 = vadd.f32 %v880, %v1029
      %v1092 = vadd.f32 %v881, %v1032
      %v1093 = vadd.f32 %v882, %v1037
      %v1094 = vadd.f32 %v883, %v1040
      %v1095 = vadd.f32 %v884, %v1045
      %v1096 = vadd.f32 %v885, %v1048
      %v1097 = vadd.f32 %v886, %v1053
      %v1098 = vadd.f32 %v887, %v1056
      %v1099 = vadd.f32 %v888, %v1061
      %v1100 = vadd.f32 %v889, %v1064
      %v1101 = vadd.f32 %v890, %v1069
      %v1102 = vadd.f32 %v891, %v1072
      %v1103 = vadd.f32 %v892, %v1077
      %v1104 = vadd.f32 %v893, %v1080
      %v1105 = vadd.f32 %v894, %v1085
      %v1106 = vadd.f32 %v895, %v1088
      %v1107 = vld [vmem:[%s5] sm:$0x1]
      %v1109 = vlaneseq
      %v1110 = vshrl.u32 %v1109, 7
      %v1111 = vsub.s32 0, %v1110
      %v1112 = vrot.slane %v1107, %v1111
      %v1114 = vadd.f32 %v1091, %v1112
      %v1115 = vadd.f32 %v1092, %v1112
      %v1116 = vadd.f32 %v1093, %v1112
      %v1117 = vadd.f32 %v1094, %v1112
      %v1118 = vadd.f32 %v1095, %v1112
      %v1119 = vadd.f32 %v1096, %v1112
      %v1120 = vadd.f32 %v1097, %v1112
      %v1121 = vadd.f32 %v1098, %v1112
      %v1122 = vadd.f32 %v1099, %v1112
      %v1123 = vadd.f32 %v1100, %v1112
      %v1124 = vadd.f32 %v1101, %v1112
      %v1125 = vadd.f32 %v1102, %v1112
      %v1126 = vadd.f32 %v1103, %v1112
      %v1127 = vadd.f32 %v1104, %v1112
      %v1128 = vadd.f32 %v1105, %v1112
      %v1129 = vadd.f32 %v1106, %v1112
      %vm1130 = vcmp.gt.f32.partialorder %v1114, 0.0
      %vm1131 = vcmp.gt.f32.partialorder %v1115, 0.0
      %vm1132 = vcmp.gt.f32.partialorder %v1116, 0.0
      %vm1133 = vcmp.gt.f32.partialorder %v1117, 0.0
      %vm1134 = vcmp.gt.f32.partialorder %v1118, 0.0
      %vm1135 = vcmp.gt.f32.partialorder %v1119, 0.0
      %vm1136 = vcmp.gt.f32.partialorder %v1120, 0.0
      %vm1137 = vcmp.gt.f32.partialorder %v1121, 0.0
      %vm1138 = vcmp.gt.f32.partialorder %v1122, 0.0
      %vm1139 = vcmp.gt.f32.partialorder %v1123, 0.0
      %vm1140 = vcmp.gt.f32.partialorder %v1124, 0.0
      %vm1141 = vcmp.gt.f32.partialorder %v1125, 0.0
      %vm1142 = vcmp.gt.f32.partialorder %v1126, 0.0
      %vm1143 = vcmp.gt.f32.partialorder %v1127, 0.0
      %vm1144 = vcmp.gt.f32.partialorder %v1128, 0.0
      %vm1145 = vcmp.gt.f32.partialorder %v1129, 0.0
      %v1146 = vmul.f32 %v912, %v1114
      %v1147 = vmul.f32 %v912, %v1115
      %v1148 = vmul.f32 %v912, %v1116
      %v1149 = vmul.f32 %v912, %v1117
      %v1150 = vmul.f32 %v912, %v1118
      %v1151 = vmul.f32 %v912, %v1119
      %v1152 = vmul.f32 %v912, %v1120
      %v1153 = vmul.f32 %v912, %v1121
      %v1154 = vmul.f32 %v912, %v1122
      %v1155 = vmul.f32 %v912, %v1123
      %v1156 = vmul.f32 %v912, %v1124
      %v1157 = vmul.f32 %v912, %v1125
      %v1158 = vmul.f32 %v912, %v1126
      %v1159 = vmul.f32 %v912, %v1127
      %v1160 = vmul.f32 %v912, %v1128
      %v1161 = vmul.f32 %v912, %v1129
      %v1162 = vsel %vm1130, %v1114, %v1146
      %v1163 = vsel %vm1131, %v1115, %v1147
      %v1164 = vsel %vm1132, %v1116, %v1148
      %v1165 = vsel %vm1133, %v1117, %v1149
      %v1166 = vsel %vm1134, %v1118, %v1150
      %v1167 = vsel %vm1135, %v1119, %v1151
      %v1168 = vsel %vm1136, %v1120, %v1152
      %v1169 = vsel %vm1137, %v1121, %v1153
      %v1170 = vsel %vm1138, %v1122, %v1154
      %v1171 = vsel %vm1139, %v1123, %v1155
      %v1172 = vsel %vm1140, %v1124, %v1156
      %v1173 = vsel %vm1141, %v1125, %v1157
      %v1174 = vsel %vm1142, %v1126, %v1158
      %v1175 = vsel %vm1143, %v1127, %v1159
      %v1176 = vsel %vm1144, %v1128, %v1160
      %v1177 = vsel %vm1145, %v1129, %v1161
      %1178 = vst.msk [vmem:[%s276] sm:$0xff] %vm969, %v1162
      %1179 = vst.msk [vmem:[%s276 + $0x8] sm:$0xff] %vm969, %v1163
      %1180 = vst.msk [vmem:[%s276 + $0x10] sm:$0xff] %vm969, %v1164
      %1181 = vst.msk [vmem:[%s276 + $0x18] sm:$0xff] %vm969, %v1165
      %1182 = vst.msk [vmem:[%s276 + $0x20] sm:$0xff] %vm969, %v1166
      %1183 = vst.msk [vmem:[%s276 + $0x28] sm:$0xff] %vm969, %v1167
      %1184 = vst.msk [vmem:[%s276 + $0x30] sm:$0xff] %vm969, %v1168
      %1185 = vst.msk [vmem:[%s276 + $0x38] sm:$0xff] %vm969, %v1169
      %1186 = vst.msk [vmem:[%s276 + $0x40] sm:$0xff] %vm969, %v1170
      %1187 = vst.msk [vmem:[%s276 + $0x48] sm:$0xff] %vm969, %v1171
      %1188 = vst.msk [vmem:[%s276 + $0x50] sm:$0xff] %vm969, %v1172
      %1189 = vst.msk [vmem:[%s276 + $0x58] sm:$0xff] %vm969, %v1173
      %1190 = vst.msk [vmem:[%s276 + $0x60] sm:$0xff] %vm969, %v1174
      %1191 = vst.msk [vmem:[%s276 + $0x68] sm:$0xff] %vm969, %v1175
      %1192 = vst.msk [vmem:[%s276 + $0x70] sm:$0xff] %vm969, %v1176
      %1193 = vst.msk [vmem:[%s276 + $0x78] sm:$0xff] %vm969, %v1177
      %s1194 = smul.u32 8, %s23
      %p1195 = scmp.lt.s32.totalorder %s22, 1
      %s1196 = scalar_select %p1195, %s22, 1
      %p1197 = scmp.lt.s32.totalorder %s1194, 15
      %s1198 = scalar_select %p1197, %s1194, 15
      %s1199 = smul.addr %s1198, 2
      %s1200 = smul.addr %s1196, 32
      %s1201 = sadd.s32 %s1199, %s1200
      %s1202 = smul.addr %s1201, 8
      %s1203 = scalar_lea.vmem %s6, %s1202
      // Predicated region
      $region45: #{gen_transpose_block.1} parent=43 // pred_check
        %p1204 = pneg %p181
      $region46: #{gen_transpose_block.1} parent=43 // pred_check_branch
        %1206 = sbr.rel (%p1204) target = $region48
      $region47: #{gen_transpose_block.1} parent=43 // pred_region
        %s1207 = smul.u32 8, %s23
      $region48: #{gen_transpose_block.1} parent=43 // pred_fallthru
        _
    $region44: #{gen_transpose_block.1} parent=5 // pred_fallthru
      _
    %p1208 = scmp.le.s32.totalorder 2, %s13
    // Predicated region
    $region49: #{gen_transpose_block.1} parent=5 // pred_check
      %p1209 = pneg %p1208
    $region50: #{gen_transpose_block.1} parent=5 // pred_check_branch
      %1211 = sbr.rel (%p1209) target = $region52
    $region51: #{gen_transpose_block.1} parent=5 // pred_region
      %s1212 = ssub.s32 %s13, 2
      // Predicated region
      $region53: #{gen_transpose_block.1} parent=51 // pred_check
        %p1213 = pneg %p187
      $region54: #{gen_transpose_block.1} parent=51 // pred_check_branch
        %1215 = sbr.rel (%p1213) target = $region56
      $region55: #{gen_transpose_block.1} parent=51 // pred_region
        %s1216 = smul.u32 8, %s25
        %p1217 = scmp.lt.s32.totalorder %s24, 1
        %s1218 = scalar_select %p1217, %s24, 1
        %p1219 = scmp.lt.s32.totalorder %s1216, 15
        %s1220 = scalar_select %p1219, %s1216, 15
        %s1221 = smul.addr %s1220, 2
        %s1222 = smul.addr %s1218, 32
        %s1223 = sadd.s32 %s1221, %s1222
        %s1224 = smul.addr %s1223, 8
        %s1225 = scalar_lea.vmem %s6, %s1224
      $region56: #{gen_transpose_block.1} parent=51 // pred_fallthru
        _
    $region52: #{gen_transpose_block.1} parent=5 // pred_fallthru
      _
  $region6: #{gen_transpose_block.1} parent=0 // loop_footer
    %s17 = sadd.s32 1, %s13
  $region7: #{gen_transpose_block.1} parent=0 // loop_footer_branch
    %12 = sbr.rel target = $region3
  $region8: #{gen_transpose_block.1} parent=0 // loop_exit
    _

</llo_original>
